<compile_context>
chip_gen: v7x
topology: tpu7x:2x2x1
jax: 0.10.0
libtpu: 0.0.40
codegen_flags: <defaults>
</compile_context>

<pallas_src>
import functools

import jax
import jax.numpy as jnp
from jax.experimental import pallas as pl
from jax.experimental.pallas import tpu as pltpu


def actor_mlp_kernel(scale_ref, state_ref, w0_ref, b0_ref, w1_ref, b1_ref,
                     w2_ref, b2_ref, out_ref, *, mxu_dtype):
    """out = (relu((x @ W0 + b0) @ W1 + b1) @ W2 + b2) * max_action.

    Matches the PyTorch module layer-by-layer (no algebraic fusion).
    `mxu_dtype` optionally casts MXU operands (bf16 on v6e/v7x at scale);
    accumulation, bias-add, ReLU and the final scale stay in f32.
    """
    f32 = jnp.float32

    # Linear0 — the module inserts NO activation after the first Linear.
    h = jnp.dot(state_ref[...].astype(mxu_dtype), w0_ref[...].astype(mxu_dtype),
                preferred_element_type=f32) + b0_ref[...]

    # Linear1 + ReLU.
    h = jnp.dot(h.astype(mxu_dtype), w1_ref[...].astype(mxu_dtype),
                preferred_element_type=f32) + b1_ref[...]
    h = jnp.maximum(h, 0.0)

    # Output Linear, scaled by max_action (runtime scalar from SMEM).
    out = jnp.dot(h.astype(mxu_dtype), w2_ref[...].astype(mxu_dtype),
                  preferred_element_type=f32) + b2_ref[...]
    out_ref[...] = (out * scale_ref[0, 0]).astype(out_ref.dtype)


def actor_forward(state, params, max_action, *, batch_tile=1024,
                  mxu_dtype=jnp.float32):
    """Actor forward.  `params` = (w0, b0, w1, b1, w2, b2), torch-transposed.

    Small batches run grid-less (all operands in VMEM); batches that are a
    multiple of `batch_tile` and at least 2 tiles switch to a 1-D parallel
    grid over batch (v7x megacore + bounded VMEM footprint).
    """
    w0, b0, w1, b1, w2, b2 = params
    batch, state_dim = state.shape
    h0 = w0.shape[1]
    h1 = w1.shape[1]
    action_dim = w2.shape[1]

    # Runtime scalar: lives in SMEM inside the kernel, so changing max_action
    # (or making it a traced value) never triggers recompilation.
    scale = jnp.asarray(max_action, jnp.float32).reshape(1, 1)

    kernel = functools.partial(actor_mlp_kernel, mxu_dtype=mxu_dtype)

    smem_spec = pl.BlockSpec(memory_space=pltpu.MemorySpace.SMEM)
    vmem_spec = pl.BlockSpec(memory_space=pltpu.MemorySpace.VMEM)

    # Advisory cost hint so XLA schedules this tiny custom call tightly.
    flops = 2 * batch * (state_dim * h0 + h0 * h1 + h1 * action_dim)
    bytes_accessed = 4 * (state.size + w0.size + b0.size + w1.size + b1.size
                          + w2.size + b2.size + batch * action_dim)
    cost = pl.CostEstimate(flops=flops, transcendentals=0,
                           bytes_accessed=bytes_accessed)

    out_shape = jax.ShapeDtypeStruct((batch, action_dim), jnp.float32)

    if batch >= 2 * batch_tile and batch % batch_tile == 0:
        # Large-batch path: tile the batch axis (multiple of 8 sublanes) and
        # mark it parallel so v7x shards it across both TensorCores; weights,
        # biases and the SMEM scalar are passed whole (untiled).
        return pl.pallas_call(
            kernel,
            grid=(batch // batch_tile,),
            out_shape=out_shape,
            in_specs=[
                smem_spec,                                                 # scale
                pl.BlockSpec((batch_tile, state_dim), lambda i: (i, 0)),  # state
                vmem_spec, vmem_spec,                                      # w0, b0
                vmem_spec, vmem_spec,                                      # w1, b1
                vmem_spec, vmem_spec,                                      # w2, b2
            ],
            out_specs=pl.BlockSpec((batch_tile, action_dim), lambda i: (i, 0)),
            compiler_params=pltpu.CompilerParams(
                dimension_semantics=("parallel",)),
            cost_estimate=cost,
        )(scale, state, w0, b0, w1, b1, w2, b2)

    # Small-batch path: grid-less, whole MLP in one invocation, all in VMEM.
    # Do NOT add a grid at these sizes — per-step bookkeeping (~0.35 us)
    # exceeds the entire compute of this MLP.
    return pl.pallas_call(
        kernel,
        out_shape=out_shape,
        in_specs=[smem_spec] + [vmem_spec] * 7,
        out_specs=vmem_spec,
        cost_estimate=cost,
    )(scale, state, w0, b0, w1, b1, w2, b2)


def init_linear(key, fan_in, fan_out):
    """Deterministic init mimicking torch.nn.Linear default (U[-1/sqrt(in), 1/sqrt(in)])."""
    kw, kb = jax.random.split(key)
    bound = 1.0 / jnp.sqrt(jnp.float32(fan_in))
    w = jax.random.uniform(kw, (fan_in, fan_out), jnp.float32, -bound, bound)
    b = jax.random.uniform(kb, (1, fan_out), jnp.float32, -bound, bound)
    return w, b


def reference_forward(state, params, max_action):
    """Layer-by-layer reference matching the PyTorch module exactly."""
    w0, b0, w1, b1, w2, b2 = params
    h = state @ w0 + b0                     # Linear0 (no activation)
    h = jnp.maximum(h @ w1 + b1, 0.0)       # Linear1 + ReLU
    return (h @ w2 + b2) * max_action       # Linear_out * max_action


if __name__ == "__main__":
    # Module-consistent shapes:
    #   state_dim=16, action_dim=8, hide_n1=2, hide_list1=[32, 32], max_action=2.0
    state_dim, action_dim = 16, 8
    hide_list1 = [32, 32]
    max_action = 2.0

    key = jax.random.PRNGKey(0)
    k_small, k_big, k0, k1, k2 = jax.random.split(key, 5)

    w0, b0 = init_linear(k0, state_dim, hide_list1[0])
    w1, b1 = init_linear(k1, hide_list1[0], hide_list1[1])
    w2, b2 = init_linear(k2, hide_list1[1], action_dim)
    params = (w0, b0, w1, b1, w2, b2)

    # 1) Small batch -> grid-less all-in-VMEM path (typical single-env action).
    state_small = jax.random.normal(k_small, (2, state_dim), jnp.float32)
    out = jax.block_until_ready(actor_forward(state_small, params, max_action))
    ref = reference_forward(state_small, params, max_action)
    assert out.shape == (2, action_dim)
    assert jnp.allclose(out, ref, atol=1e-4, rtol=1e-4)

    # 2) Batched states -> tiled, parallel-grid path (v7x megacore-friendly).
    state_big = jax.random.normal(k_big, (256, state_dim), jnp.float32)
    out_big = jax.block_until_ready(
        actor_forward(state_big, params, max_action, batch_tile=128))
    ref_big = reference_forward(state_big, params, max_action)
    assert out_big.shape == (256, action_dim)
    assert jnp.allclose(out_big, ref_big, atol=1e-4, rtol=1e-4)

    # 3) bf16-MXU-operand variant (v6e/v7x at scale); accumulate stays f32.
    out_bf16 = jax.block_until_ready(
        actor_forward(state_small, params, max_action, mxu_dtype=jnp.bfloat16))
    assert jnp.allclose(out_bf16, ref, atol=5e-2, rtol=5e-2)

    print("KERNEL_OK")
</pallas_src>

<mosaic_0001>
module attributes {stable_mosaic.version = 11 : i64} {
  func.func @actor_mlp_kernel(%arg0: memref<1x1xf32, #tpu.memory_space<smem>>, %arg1: memref<2x16xf32, #tpu.memory_space<vmem>>, %arg2: memref<16x32xf32, #tpu.memory_space<vmem>>, %arg3: memref<1x32xf32, #tpu.memory_space<vmem>>, %arg4: memref<32x32xf32, #tpu.memory_space<vmem>>, %arg5: memref<1x32xf32, #tpu.memory_space<vmem>>, %arg6: memref<32x8xf32, #tpu.memory_space<vmem>>, %arg7: memref<1x8xf32, #tpu.memory_space<vmem>>, %arg8: memref<2x8xf32, #tpu.memory_space<vmem>>) attributes {dimension_semantics = [], scalar_prefetch = 0 : i64, scratch_operands = 0 : i64, tpu.core_type = #tpu.core_type<tc>} {
    %c0 = arith.constant 0 : index
    %c0_0 = arith.constant 0 : index
    %0 = vector.load %arg1[%c0, %c0_0] : memref<2x16xf32, #tpu.memory_space<vmem>>, vector<2x16xf32>
    %c0_1 = arith.constant 0 : index
    %c0_2 = arith.constant 0 : index
    %1 = vector.load %arg2[%c0_1, %c0_2] : memref<16x32xf32, #tpu.memory_space<vmem>>, vector<16x32xf32>
    %cst = arith.constant dense<0.000000e+00> : vector<2x32xf32>
    %2 = tpu.matmul %0, %1, %cst {dimension_numbers = #tpu.dot_dimension_numbers<[1], [0], [0], [1], [0, 0, 1, 1], [], []>} : vector<2x16xf32>, vector<16x32xf32>, vector<2x32xf32> -> vector<2x32xf32>
    %c0_3 = arith.constant 0 : index
    %c0_4 = arith.constant 0 : index
    %3 = vector.load %arg3[%c0_3, %c0_4] : memref<1x32xf32, #tpu.memory_space<vmem>>, vector<1x32xf32>
    %4 = vector.broadcast %3 : vector<1x32xf32> to vector<2x32xf32>
    %5 = arith.addf %2, %4 : vector<2x32xf32>
    %c0_5 = arith.constant 0 : index
    %c0_6 = arith.constant 0 : index
    %6 = vector.load %arg4[%c0_5, %c0_6] : memref<32x32xf32, #tpu.memory_space<vmem>>, vector<32x32xf32>
    %cst_7 = arith.constant dense<0.000000e+00> : vector<2x32xf32>
    %7 = tpu.matmul %5, %6, %cst_7 {dimension_numbers = #tpu.dot_dimension_numbers<[1], [0], [0], [1], [0, 0, 1, 1], [], []>} : vector<2x32xf32>, vector<32x32xf32>, vector<2x32xf32> -> vector<2x32xf32>
    %c0_8 = arith.constant 0 : index
    %c0_9 = arith.constant 0 : index
    %8 = vector.load %arg5[%c0_8, %c0_9] : memref<1x32xf32, #tpu.memory_space<vmem>>, vector<1x32xf32>
    %9 = vector.broadcast %8 : vector<1x32xf32> to vector<2x32xf32>
    %10 = arith.addf %7, %9 : vector<2x32xf32>
    %cst_10 = arith.constant 0.000000e+00 : f32
    %11 = vector.broadcast %cst_10 : f32 to vector<2x32xf32>
    %12 = arith.maximumf %10, %11 : vector<2x32xf32>
    %c0_11 = arith.constant 0 : index
    %c0_12 = arith.constant 0 : index
    %13 = vector.load %arg6[%c0_11, %c0_12] : memref<32x8xf32, #tpu.memory_space<vmem>>, vector<32x8xf32>
    %cst_13 = arith.constant dense<0.000000e+00> : vector<2x8xf32>
    %14 = tpu.matmul %12, %13, %cst_13 {dimension_numbers = #tpu.dot_dimension_numbers<[1], [0], [0], [1], [0, 0, 1, 1], [], []>} : vector<2x32xf32>, vector<32x8xf32>, vector<2x8xf32> -> vector<2x8xf32>
    %c0_14 = arith.constant 0 : index
    %c0_15 = arith.constant 0 : index
    %15 = vector.load %arg7[%c0_14, %c0_15] : memref<1x8xf32, #tpu.memory_space<vmem>>, vector<1x8xf32>
    %16 = vector.broadcast %15 : vector<1x8xf32> to vector<2x8xf32>
    %17 = arith.addf %14, %16 : vector<2x8xf32>
    %c0_16 = arith.constant 0 : index
    %c0_17 = arith.constant 0 : index
    %18 = memref.load %arg0[%c0_16, %c0_17] : memref<1x1xf32, #tpu.memory_space<smem>>
    %19 = vector.broadcast %18 : f32 to vector<2x8xf32>
    %20 = arith.mulf %17, %19 : vector<2x8xf32>
    %c0_18 = arith.constant 0 : index
    %c0_19 = arith.constant 0 : index
    %21 = vector.load %arg8[%c0_18, %c0_19] : memref<2x8xf32, #tpu.memory_space<vmem>>, vector<2x8xf32>
    tpu.vector_store %arg8[%c0_18, %c0_19], %20 {strides = array<i32>} : memref<2x8xf32, #tpu.memory_space<vmem>>, vector<2x8xf32>,
    return
  }
}

</mosaic_0001>

<llo_original>
// kernel: tpu_custom_call.1
$region0: #{tpu_custom_call.1}
  #allocation0 [shape = 'u32[]', space=smem, size = 0x4, offset = 0x4, fixed_abs, tag = 'smem constant byte address 0x4 - core index']
  #allocation1 [shape = 'u32[144,128]{1,0:T(1,128)}', space=vmem, size = 0x12000, scoped, tag = 'internal scratch']
  #allocation2 [shape = 'f32[1,1]{1,0:T(1,128)S(6)}', space=smem, size = 0x200, scoped, tag = 'scoped memory for tpu_custom_call.1']
  %s0 = inlined_call_operand.<no memory space> [shape: f32[1,1], index: 0, kind: input, shape index: {}]
  %s1 = inlined_call_operand.vmem [shape: f32[2,16], index: 1, kind: input, shape index: {}]
  %s2 = inlined_call_operand.vmem [shape: f32[16,32], index: 2, kind: input, shape index: {}]
  %s3 = inlined_call_operand.hbm [shape: f32[1,32], index: 3, kind: input, shape index: {}]
  %s4 = inlined_call_operand.vmem [shape: f32[32,32], index: 4, kind: input, shape index: {}]
  %s5 = inlined_call_operand.hbm [shape: f32[1,32], index: 5, kind: input, shape index: {}]
  %s6 = inlined_call_operand.vmem [shape: f32[32,8], index: 6, kind: input, shape index: {}]
  %s7 = inlined_call_operand.vmem [shape: f32[1,8], index: 7, kind: input, shape index: {}]
  %s8 = inlined_call_operand.hbm [shape: f32[2,8], index: 8, kind: output, shape index: {}]
  %s9 = sld [smem:[#allocation0]]
  $region50: #{tpu_custom_call.1} parent=0
    _
  %s11 = ssub.s32 1, %s9
  %s12 = scalar_select 0, %s11, %s9
  %13 = sst [smem:[#allocation2]] %s0
  $region1: #{tpu_custom_call.1} parent=0
    #allocation3 [shape = 'u8[512]{0}', space=vmem, size = 0x400, scoped, tag = 'input window, operand 3, single buffered']
    #allocation4 [shape = 's32[1]{0}', space=sflag, size = 0x4, scoped, tag = 'scoped memory for tpu_custom_call.1']
    #allocation5 [shape = 's32[1]{0}', space=sflag, size = 0x4, scoped, tag = 'scoped memory for tpu_custom_call.1']
    #allocation6 [shape = 'u8[512]{0}', space=vmem, size = 0x400, scoped, tag = 'input window, operand 5, single buffered']
    #allocation7 [shape = 's32[1]{0}', space=sflag, size = 0x4, scoped, tag = 'scoped memory for tpu_custom_call.1']
    #allocation8 [shape = 'u8[1024]{0}', space=vmem, size = 0x400, scoped, tag = 'output window, operand 0, single buffered']
    %14 = vsyncpa [#allocation4], 0
    %15 = vsyncpa [#allocation7], 0
    %16 = vsyncpa [#allocation5], 0
    // Predicated region
    $region2: #{tpu_custom_call.1} parent=1 // pred_check
      _
    $region3: #{tpu_custom_call.1} parent=1 // pred_check_branch
      %18 = sbr.rel (0) target = $region5
    $region4: #{tpu_custom_call.1} parent=1 // pred_region
      _
    $region5: #{tpu_custom_call.1} parent=1 // pred_fallthru
      _
    // Predicated region
    $region6: #{tpu_custom_call.1} parent=1 // pred_check
      _
    $region7: #{tpu_custom_call.1} parent=1 // pred_check_branch
      %20 = sbr.rel (0) target = $region9
    $region8: #{tpu_custom_call.1} parent=1 // pred_region
      _
    $region9: #{tpu_custom_call.1} parent=1 // pred_fallthru
      _
    // Predicated region
    $region10: #{tpu_custom_call.1} parent=1 // pred_check
      _
    $region11: #{tpu_custom_call.1} parent=1 // pred_check_branch
      %22 = sbr.rel (0) target = $region13
    $region12: #{tpu_custom_call.1} parent=1 // pred_region
      _
    $region13: #{tpu_custom_call.1} parent=1 // pred_fallthru
      _
    // Predicated region
    $region14: #{tpu_custom_call.1} parent=1 // pred_check
      _
    $region15: #{tpu_custom_call.1} parent=1 // pred_check_branch
      %24 = sbr.rel (0) target = $region17
    $region16: #{tpu_custom_call.1} parent=1 // pred_region
      %s26 = ssub.s32 16, 16
      %27 = vsyncadd [#allocation4], %s26
      %s29 = sshll.u32 [#allocation3], 4
      %s30 = int_to_ptr.vmem [resolvable:$true] %s29
      %32 = dma.hbm_to_vmem [thread:$0]  %s3, 16, %s30, [#allocation4]
    $region17: #{tpu_custom_call.1} parent=1 // pred_fallthru
      _
    // Predicated region
    $region18: #{tpu_custom_call.1} parent=1 // pred_check
      _
    $region19: #{tpu_custom_call.1} parent=1 // pred_check_branch
      %34 = sbr.rel (0) target = $region21
    $region20: #{tpu_custom_call.1} parent=1 // pred_region
      _
    $region21: #{tpu_custom_call.1} parent=1 // pred_fallthru
      _
    // Predicated region
    $region22: #{tpu_custom_call.1} parent=1 // pred_check
      _
    $region23: #{tpu_custom_call.1} parent=1 // pred_check_branch
      %36 = sbr.rel (0) target = $region25
    $region24: #{tpu_custom_call.1} parent=1 // pred_region
      %s38 = ssub.s32 16, 16
      %39 = vsyncadd [#allocation7], %s38
      %s41 = sshll.u32 [#allocation6], 4
      %s42 = int_to_ptr.vmem [resolvable:$true] %s41
      %44 = dma.hbm_to_vmem [thread:$0]  %s5, 16, %s42, [#allocation7]
    $region25: #{tpu_custom_call.1} parent=1 // pred_fallthru
      _
    // Predicated region
    $region26: #{tpu_custom_call.1} parent=1 // pred_check
      _
    $region27: #{tpu_custom_call.1} parent=1 // pred_check_branch
      %46 = sbr.rel (0) target = $region29
    $region28: #{tpu_custom_call.1} parent=1 // pred_region
      _
    $region29: #{tpu_custom_call.1} parent=1 // pred_fallthru
      _
    // Predicated region
    $region30: #{tpu_custom_call.1} parent=1 // pred_check
      _
    $region31: #{tpu_custom_call.1} parent=1 // pred_check_branch
      %48 = sbr.rel (0) target = $region33
    $region32: #{tpu_custom_call.1} parent=1 // pred_region
      _
    $region33: #{tpu_custom_call.1} parent=1 // pred_fallthru
      _
    // Predicated region
    $region34: #{tpu_custom_call.1} parent=1 // pred_check
      _
    $region35: #{tpu_custom_call.1} parent=1 // pred_check_branch
      %50 = sbr.rel (0) target = $region37
    $region36: #{tpu_custom_call.1} parent=1 // pred_region
      %51 = dma.done [#allocation4], 16
    $region37: #{tpu_custom_call.1} parent=1 // pred_fallthru
      _
    // Predicated region
    $region38: #{tpu_custom_call.1} parent=1 // pred_check
      _
    $region39: #{tpu_custom_call.1} parent=1 // pred_check_branch
      %53 = sbr.rel (0) target = $region41
    $region40: #{tpu_custom_call.1} parent=1 // pred_region
      %54 = dma.done [#allocation7], 16
    $region41: #{tpu_custom_call.1} parent=1 // pred_fallthru
      _
    %v55 = vld [vmem:[%s1] sm:$0x3]
    %v56 = vld [vmem:[%s2] sm:$0xff]
    %v57 = vld [vmem:[%s2 + $0x8] sm:$0xff]
    %v58 = vld [vmem:[#allocation3] sm:$0x1]
    %v60 = vlaneseq
    %v61 = vshrl.u32 %v60, 7
    %v62 = vsub.s32 0, %v61
    %v63 = vrot.slane %v58, %v62
    %vm65 = vcmask 130048
    %v67 = vsel %vm65, %v55, 0
    %69 = vmatprep.subr.mxu0 0.0
    %70 = vmatpush1.msra.mxu0 %v56
    %71 = vmatprep.subr.mxu0 0.0
    %72 = vmatpush1.msra.mxu0 %v57
    %73 = vmatprep.subr.mxu0 0.0
    %74 = vmatpush1.msra.mxu0 0.0
    %75 = vmatprep.subr.mxu0 0.0
    %76 = vmatpush1.msra.mxu0 0.0
    %77 = vmatprep.subr.mxu0 0.0
    %78 = vmatpush1.msra.mxu0 0.0
    %79 = vmatprep.subr.mxu0 0.0
    %80 = vmatpush1.msra.mxu0 0.0
    %81 = vmatprep.subr.mxu0 0.0
    %82 = vmatpush1.msra.mxu0 0.0
    %83 = vmatprep.subr.mxu0 0.0
    %84 = vmatpush1.msra.mxu0 0.0
    %85 = vmatprep.subr.mxu0 0.0
    %86 = vmatpush1.msra.mxu0 0.0
    %87 = vmatprep.subr.mxu0 0.0
    %88 = vmatpush1.msra.mxu0 0.0
    %89 = vmatprep.subr.mxu0 0.0
    %90 = vmatpush1.msra.mxu0 0.0
    %91 = vmatprep.subr.mxu0 0.0
    %92 = vmatpush1.msra.mxu0 0.0
    %93 = vmatprep.subr.mxu0 0.0
    %94 = vmatpush1.msra.mxu0 0.0
    %95 = vmatprep.subr.mxu0 0.0
    %96 = vmatpush1.msra.mxu0 0.0
    %97 = vmatprep.subr.mxu0 0.0
    %98 = vmatpush1.msra.mxu0 0.0
    %99 = vmatprep.subr.mxu0 0.0
    %100 = vmatpush1.msra.mxu0 0.0
    %101 = vmatprep.subr.mxu0 0.0
    %102 = vmatpush1.msra.mxu0 0.0
    %103 = vmatprep.subr.mxu0 0.0
    %104 = vmatpush1.msra.mxu0 0.0
    %105 = vmatprep.subr.mxu0 0.0
    %106 = vmatpush1.msra.mxu0 0.0
    %107 = vmatprep.subr.mxu0 0.0
    %108 = vmatpush1.msra.mxu0 0.0
    %109 = vmatprep.subr.mxu0 0.0
    %110 = vmatpush1.msra.mxu0 0.0
    %111 = vmatprep.subr.mxu0 0.0
    %112 = vmatpush1.msra.mxu0 0.0
    %113 = vmatprep.subr.mxu0 0.0
    %114 = vmatpush1.msra.mxu0 0.0
    %115 = vmatprep.subr.mxu0 0.0
    %116 = vmatpush1.msra.mxu0 0.0
    %117 = vmatprep.subr.mxu0 0.0
    %118 = vmatpush1.msra.mxu0 0.0
    %119 = vmatprep.subr.mxu0 0.0
    %120 = vmatpush1.msra.mxu0 0.0
    %121 = vmatprep.subr.mxu0 0.0
    %122 = vmatpush1.msra.mxu0 0.0
    %123 = vmatprep.subr.mxu0 0.0
    %124 = vmatpush1.msra.mxu0 0.0
    %125 = vmatprep.subr.mxu0 0.0
    %126 = vmatpush1.msra.mxu0 0.0
    %127 = vmatprep.subr.mxu0 0.0
    %128 = vmatpush1.msra.mxu0 0.0
    %129 = vmatprep.subr.mxu0 0.0
    %130 = vmatpush1.msra.mxu0 0.0
    %131 = vmatprep.subr.mxu0 0.0
    %132 = vmatpush1.msra.mxu0 0.0
    %133 = vmatprep.mubr.f32.mxu0 0.0
    %134 = vmatmul.mubr.f32.gmra.mrb[0].mxu0 %v67
    %v135 = vpop.f32.mrb[0].mxu0
    %v136 = vadd.f32 %v63, %v135
    %v137 = vpop.f32.mrb[0].mxu0
    %138 = vdwg.mxu0
    %v139 = vld [vmem:[%s4] sm:$0xff]
    %v140 = vld [vmem:[%s4 + $0x8] sm:$0xff]
    %v141 = vld [vmem:[%s4 + $0x10] sm:$0xff]
    %v142 = vld [vmem:[%s4 + $0x18] sm:$0xff]
    %v143 = vld [vmem:[#allocation6] sm:$0x1]
    %v145 = vlaneseq
    %v146 = vshrl.u32 %v145, 7
    %v147 = vsub.s32 0, %v146
    %v148 = vrot.slane %v143, %v147
    %vm150 = vcmask 261120
    %v152 = vsel %vm150, %v136, 0
    %154 = vmatprep.subr.mxu0 0.0
    %155 = vmatpush1.msra.mxu0 %v139
    %156 = vmatprep.subr.mxu0 0.0
    %157 = vmatpush1.msra.mxu0 %v140
    %158 = vmatprep.subr.mxu0 0.0
    %159 = vmatpush1.msra.mxu0 %v141
    %160 = vmatprep.subr.mxu0 0.0
    %161 = vmatpush1.msra.mxu0 %v142
    %162 = vmatprep.subr.mxu0 0.0
    %163 = vmatpush1.msra.mxu0 0.0
    %164 = vmatprep.subr.mxu0 0.0
    %165 = vmatpush1.msra.mxu0 0.0
    %166 = vmatprep.subr.mxu0 0.0
    %167 = vmatpush1.msra.mxu0 0.0
    %168 = vmatprep.subr.mxu0 0.0
    %169 = vmatpush1.msra.mxu0 0.0
    %170 = vmatprep.subr.mxu0 0.0
    %171 = vmatpush1.msra.mxu0 0.0
    %172 = vmatprep.subr.mxu0 0.0
    %173 = vmatpush1.msra.mxu0 0.0
    %174 = vmatprep.subr.mxu0 0.0
    %175 = vmatpush1.msra.mxu0 0.0
    %176 = vmatprep.subr.mxu0 0.0
    %177 = vmatpush1.msra.mxu0 0.0
    %178 = vmatprep.subr.mxu0 0.0
    %179 = vmatpush1.msra.mxu0 0.0
    %180 = vmatprep.subr.mxu0 0.0
    %181 = vmatpush1.msra.mxu0 0.0
    %182 = vmatprep.subr.mxu0 0.0
    %183 = vmatpush1.msra.mxu0 0.0
    %184 = vmatprep.subr.mxu0 0.0
    %185 = vmatpush1.msra.mxu0 0.0
    %186 = vmatprep.subr.mxu0 0.0
    %187 = vmatpush1.msra.mxu0 0.0
    %188 = vmatprep.subr.mxu0 0.0
    %189 = vmatpush1.msra.mxu0 0.0
    %190 = vmatprep.subr.mxu0 0.0
    %191 = vmatpush1.msra.mxu0 0.0
    %192 = vmatprep.subr.mxu0 0.0
    %193 = vmatpush1.msra.mxu0 0.0
    %194 = vmatprep.subr.mxu0 0.0
    %195 = vmatpush1.msra.mxu0 0.0
    %196 = vmatprep.subr.mxu0 0.0
    %197 = vmatpush1.msra.mxu0 0.0
    %198 = vmatprep.subr.mxu0 0.0
    %199 = vmatpush1.msra.mxu0 0.0
    %200 = vmatprep.subr.mxu0 0.0
    %201 = vmatpush1.msra.mxu0 0.0
    %202 = vmatprep.subr.mxu0 0.0
    %203 = vmatpush1.msra.mxu0 0.0
    %204 = vmatprep.subr.mxu0 0.0
    %205 = vmatpush1.msra.mxu0 0.0
    %206 = vmatprep.subr.mxu0 0.0
    %207 = vmatpush1.msra.mxu0 0.0
    %208 = vmatprep.subr.mxu0 0.0
    %209 = vmatpush1.msra.mxu0 0.0
    %210 = vmatprep.subr.mxu0 0.0
    %211 = vmatpush1.msra.mxu0 0.0
    %212 = vmatprep.subr.mxu0 0.0
    %213 = vmatpush1.msra.mxu0 0.0
    %214 = vmatprep.subr.mxu0 0.0
    %215 = vmatpush1.msra.mxu0 0.0
    %216 = vmatprep.subr.mxu0 0.0
    %217 = vmatpush1.msra.mxu0 0.0
    %218 = vmatprep.mubr.f32.mxu0 0.0
    %219 = vmatmul.mubr.f32.gmra.mrb[0].mxu0 %v152
    %v220 = vpop.f32.mrb[0].mxu0
    %v221 = vadd.f32 %v148, %v220
    %v222 = vpop.f32.mrb[0].mxu0
    %223 = vdwg.mxu0
    %v224 = vmax.f32 %v221, 0.0
    %v225 = vld [vmem:[%s6] sm:$0xff]
    %v226 = vld [vmem:[%s6 + $0x8] sm:$0xff]
    %v227 = vld [vmem:[%s6 + $0x10] sm:$0xff]
    %v228 = vld [vmem:[%s6 + $0x18] sm:$0xff]
    %v229 = vld [vmem:[%s7] sm:$0x1]
    %v231 = vlaneseq
    %v232 = vshrl.u32 %v231, 7
    %v233 = vsub.s32 0, %v232
    %v234 = vrot.slane %v229, %v233
    %v237 = vsel %vm150, %v224, 0
    %239 = vmatprep.subr.mxu0 0.0
    %240 = vmatpush1.msra.mxu0 %v225
    %241 = vmatprep.subr.mxu0 0.0
    %242 = vmatpush1.msra.mxu0 %v226
    %243 = vmatprep.subr.mxu0 0.0
    %244 = vmatpush1.msra.mxu0 %v227
    %245 = vmatprep.subr.mxu0 0.0
    %246 = vmatpush1.msra.mxu0 %v228
    %247 = vmatprep.subr.mxu0 0.0
    %248 = vmatpush1.msra.mxu0 0.0
    %249 = vmatprep.subr.mxu0 0.0
    %250 = vmatpush1.msra.mxu0 0.0
    %251 = vmatprep.subr.mxu0 0.0
    %252 = vmatpush1.msra.mxu0 0.0
    %253 = vmatprep.subr.mxu0 0.0
    %254 = vmatpush1.msra.mxu0 0.0
    %255 = vmatprep.subr.mxu0 0.0
    %256 = vmatpush1.msra.mxu0 0.0
    %257 = vmatprep.subr.mxu0 0.0
    %258 = vmatpush1.msra.mxu0 0.0
    %259 = vmatprep.subr.mxu0 0.0
    %260 = vmatpush1.msra.mxu0 0.0
    %261 = vmatprep.subr.mxu0 0.0
    %262 = vmatpush1.msra.mxu0 0.0
    %263 = vmatprep.subr.mxu0 0.0
    %264 = vmatpush1.msra.mxu0 0.0
    %265 = vmatprep.subr.mxu0 0.0
    %266 = vmatpush1.msra.mxu0 0.0
    %267 = vmatprep.subr.mxu0 0.0
    %268 = vmatpush1.msra.mxu0 0.0
    %269 = vmatprep.subr.mxu0 0.0
    %270 = vmatpush1.msra.mxu0 0.0
    %271 = vmatprep.subr.mxu0 0.0
    %272 = vmatpush1.msra.mxu0 0.0
    %273 = vmatprep.subr.mxu0 0.0
    %274 = vmatpush1.msra.mxu0 0.0
    %275 = vmatprep.subr.mxu0 0.0
    %276 = vmatpush1.msra.mxu0 0.0
    %277 = vmatprep.subr.mxu0 0.0
    %278 = vmatpush1.msra.mxu0 0.0
    %279 = vmatprep.subr.mxu0 0.0
    %280 = vmatpush1.msra.mxu0 0.0
    %281 = vmatprep.subr.mxu0 0.0
    %282 = vmatpush1.msra.mxu0 0.0
    %283 = vmatprep.subr.mxu0 0.0
    %284 = vmatpush1.msra.mxu0 0.0
    %285 = vmatprep.subr.mxu0 0.0
    %286 = vmatpush1.msra.mxu0 0.0
    %287 = vmatprep.subr.mxu0 0.0
    %288 = vmatpush1.msra.mxu0 0.0
    %289 = vmatprep.subr.mxu0 0.0
    %290 = vmatpush1.msra.mxu0 0.0
    %291 = vmatprep.subr.mxu0 0.0
    %292 = vmatpush1.msra.mxu0 0.0
    %293 = vmatprep.subr.mxu0 0.0
    %294 = vmatpush1.msra.mxu0 0.0
    %295 = vmatprep.subr.mxu0 0.0
    %296 = vmatpush1.msra.mxu0 0.0
    %297 = vmatprep.subr.mxu0 0.0
    %298 = vmatpush1.msra.mxu0 0.0
    %299 = vmatprep.subr.mxu0 0.0
    %300 = vmatpush1.msra.mxu0 0.0
    %301 = vmatprep.subr.mxu0 0.0
    %302 = vmatpush1.msra.mxu0 0.0
    %303 = vmatprep.mubr.f32.mxu0 0.0
    %304 = vmatmul.mubr.f32.gmra.mrb[0].mxu0 %v237
    %v305 = vpop.f32.mrb[0].mxu0
    %v306 = vadd.f32 %v234, %v305
    %v307 = vpop.f32.mrb[0].mxu0
    %308 = vdwg.mxu0
    %s309 = sld [smem:[#allocation2]]
    %v310 = vstv %s309
    %v311 = vmul.f32 %v306, %v310
    %vm312 = vcmask 58368
    %313 = vst.msk [vmem:[#allocation8] sm:$0x3] %vm312, %v311
    // Predicated region
    $region42: #{tpu_custom_call.1} parent=1 // pred_check
      _
    $region43: #{tpu_custom_call.1} parent=1 // pred_check_branch
      %315 = sbr.rel (0) target = $region45
    $region44: #{tpu_custom_call.1} parent=1 // pred_region
      %s317 = ssub.s32 32, 32
      %318 = vsyncadd [#allocation5], %s317
      %s320 = sshll.u32 [#allocation8], 4
      %s321 = int_to_ptr.vmem [resolvable:$true] %s320
      %323 = dma.vmem_to_hbm [thread:$0]  %s321, 32, %s8, [#allocation5]
    $region45: #{tpu_custom_call.1} parent=1 // pred_fallthru
      _
    // Predicated region
    $region46: #{tpu_custom_call.1} parent=1 // pred_check
      _
    $region47: #{tpu_custom_call.1} parent=1 // pred_check_branch
      %325 = sbr.rel (0) target = $region49
    $region48: #{tpu_custom_call.1} parent=1 // pred_region
      %326 = dma.done [#allocation5], 32
    $region49: #{tpu_custom_call.1} parent=1 // pred_fallthru
      _
    %327 = vsyncpa [#allocation4], 1
    %328 = vsyncpa [#allocation7], 1
    %329 = vsyncpa [#allocation5], 1

</llo_original>
